<compile_context>
chip_gen: v7x
topology: tpu7x:2x2x1
jax: 0.10.0
libtpu: 0.0.40
codegen_flags: <defaults>
</compile_context>

<pallas_src>
import jax
import jax.numpy as jnp
from jax.experimental import pallas as pl
from jax.experimental.pallas import tpu as pltpu

N_IN, N_H1, N_H2, N_OUT = 2, 8, 8, 3
LANES = 128
SUBLANES = 8


def mlp_kernel(w1_ref, b1_ref, w2_ref, b2_ref, w3_ref, b3_ref, x_ref, o_ref):
    # x_ref: (2, TILE_S, 128) f32 in VMEM (batch on sublane/lane axes).
    # o_ref: (3, TILE_S, 128) f32 in VMEM.
    # w*/b*: flat 1-D f32 in SMEM, row-major (in, out).
    x = [x_ref[k] for k in range(N_IN)]                     # dense (TILE_S, 128)

    # Layer 1: 2 -> 8, ReLU.  Scalar-broadcast mul/adds on the VPU.
    h1 = []
    for j in range(N_H1):
        acc = x[0] * w1_ref[0 * N_H1 + j]
        for k in range(1, N_IN):
            acc = acc + x[k] * w1_ref[k * N_H1 + j]
        h1.append(jnp.maximum(acc + b1_ref[j], 0.0))

    # Layer 2: 8 -> 8, ReLU.
    h2 = []
    for j in range(N_H2):
        acc = h1[0] * w2_ref[0 * N_H2 + j]
        for k in range(1, N_H1):
            acc = acc + h1[k] * w2_ref[k * N_H2 + j]
        h2.append(jnp.maximum(acc + b2_ref[j], 0.0))

    # Layer 3: 8 -> 3, no activation.  Lane-dense full-width stores.
    for j in range(N_OUT):
        acc = h2[0] * w3_ref[0 * N_OUT + j]
        for k in range(1, N_H2):
            acc = acc + h2[k] * w3_ref[k * N_OUT + j]
        o_ref[j] = (acc + b3_ref[j]).astype(o_ref.dtype)


def _pick_tile_s(n_rows):
    """Sublane-tile count per grid step; each step covers tile_s*128 rows."""
    try:
        kind = jax.devices()[0].device_kind.lower()
    except Exception:
        kind = ""
    if "v5" in kind or "v6" in kind:
        # 128 MiB VMEM: big tiles amortize the ~0.35us/step overhead.
        # 2048 sublanes -> (2+3)*2048*128*4 = 5 MiB/step, 10 MiB double-buffered.
        target = 2048
    else:
        # v7x (64 MiB VMEM) / unknown: be conservative (5 MiB double-buffered).
        target = 1024
    needed = -(-n_rows // LANES)                       # sublane rows required
    needed = -(-needed // SUBLANES) * SUBLANES         # round up to 8
    return max(SUBLANES, min(target, needed))


def ann_forward(x, params, tile_s=None):
    """x: (N, 2) f32; params: (W1,b1,W2,b2,W3,b3) with W (in, out), b (1, out)."""
    w1, b1, w2, b2, w3, b3 = params
    n = x.shape[0]
    if tile_s is None:
        tile_s = _pick_tile_s(n)
    rows_per_block = tile_s * LANES
    n_blocks = -(-n // rows_per_block)
    n_pad = n_blocks * rows_per_block
    s_total = n_pad // LANES

    # Feature-major, lane-dense layout: (features, sublane rows, 128 lanes).
    x_fm = jnp.transpose(x)                                    # (2, N)
    x_fm = jnp.pad(x_fm, ((0, 0), (0, n_pad - n)))             # (2, N_pad)
    x_fm = x_fm.reshape(N_IN, s_total, LANES)

    # Flatten weights/biases to 1-D for cheap scalar SMEM reads.
    flat = [w1.reshape(-1), b1.reshape(-1), w2.reshape(-1), b2.reshape(-1),
            w3.reshape(-1), b3.reshape(-1)]

    smem_spec = lambda: pl.BlockSpec(memory_space=pltpu.MemorySpace.SMEM)
    flops = 2 * (N_IN * N_H1 + N_H1 * N_H2 + N_H2 * N_OUT) * n_pad
    bytes_accessed = 4 * (N_IN + N_OUT) * n_pad + 4 * sum(int(a.size) for a in flat)

    out_fm = pl.pallas_call(
        mlp_kernel,
        out_shape=jax.ShapeDtypeStruct((N_OUT, s_total, LANES), jnp.float32),
        grid_spec=pltpu.PrefetchScalarGridSpec(
            num_scalar_prefetch=0,
            grid=(n_blocks,),
            in_specs=[smem_spec() for _ in range(6)] + [
                pl.BlockSpec((N_IN, tile_s, LANES), lambda i: (0, i, 0)),
            ],
            out_specs=pl.BlockSpec((N_OUT, tile_s, LANES), lambda i: (0, i, 0)),
        ),
        compiler_params=pltpu.CompilerParams(
            dimension_semantics=("parallel",),
            vmem_limit_bytes=32 * 1024 * 1024,
        ),
        cost_estimate=pl.CostEstimate(
            flops=flops, transcendentals=0, bytes_accessed=bytes_accessed),
    )(*flat, x_fm)

    # Back to row-major (N, 3).
    out = out_fm.reshape(N_OUT, n_pad).T
    return out[:n]


def init_params(key):
    """Deterministic init mimicking nn.Linear's uniform(-1/sqrt(fan_in), +)."""
    def linear(k, fan_in, fan_out):
        kw, kb = jax.random.split(k)
        bound = 1.0 / jnp.sqrt(float(fan_in))
        w = jax.random.uniform(kw, (fan_in, fan_out), jnp.float32, -bound, bound)
        b = jax.random.uniform(kb, (1, fan_out), jnp.float32, -bound, bound)
        return w, b

    k1, k2, k3 = jax.random.split(key, 3)
    w1, b1 = linear(k1, 2, 8)
    w2, b2 = linear(k2, 8, 8)
    w3, b3 = linear(k3, 8, 3)
    return w1, b1, w2, b2, w3, b3


def ann_forward_ref(x, params):
    w1, b1, w2, b2, w3, b3 = params
    h = jnp.maximum(x @ w1 + b1, 0.0)
    h = jnp.maximum(h @ w2 + b2, 0.0)
    return h @ w3 + b3


if __name__ == "__main__":
    key = jax.random.PRNGKey(0)
    kx, kp = jax.random.split(key)
    x = jax.random.normal(kx, (8, 2), jnp.float32)   # batch=8, features=2
    params = init_params(kp)

    out = ann_forward(x, params)
    jax.block_until_ready(out)

    ref = ann_forward_ref(x, params)
    assert out.shape == (8, 3), out.shape
    assert jnp.allclose(out, ref, atol=1e-5, rtol=1e-5)
    print("KERNEL_OK")
</pallas_src>

<mosaic_0001>
module attributes {stable_mosaic.version = 11 : i64} {
  func.func @mlp_kernel(%arg0: i32, %arg1: memref<16xf32, #tpu.memory_space<smem>>, %arg2: memref<8xf32, #tpu.memory_space<smem>>, %arg3: memref<64xf32, #tpu.memory_space<smem>>, %arg4: memref<8xf32, #tpu.memory_space<smem>>, %arg5: memref<24xf32, #tpu.memory_space<smem>>, %arg6: memref<3xf32, #tpu.memory_space<smem>>, %arg7: memref<2x8x128xf32, #tpu.memory_space<vmem>>, %arg8: memref<3x8x128xf32, #tpu.memory_space<vmem>>) attributes {dimension_semantics = [#tpu.dimension_semantics<parallel>], iteration_bounds = array<i64: 1>, scalar_prefetch = 0 : i64, scratch_operands = 0 : i64, tpu.core_type = #tpu.core_type<tc>, window_params = [{transform_indices = @transform_0, window_bounds = array<i64: 16>}, {transform_indices = @transform_1, window_bounds = array<i64: 8>}, {transform_indices = @transform_2, window_bounds = array<i64: 64>}, {transform_indices = @transform_3, window_bounds = array<i64: 8>}, {transform_indices = @transform_4, window_bounds = array<i64: 24>}, {transform_indices = @transform_5, window_bounds = array<i64: 3>}, {transform_indices = @transform_6, window_bounds = array<i64: 2, 8, 128>}, {transform_indices = @transform_7, window_bounds = array<i64: 3, 8, 128>}]} {
    %c0 = arith.constant 0 : index
    %c0_0 = arith.constant 0 : index
    %c0_1 = arith.constant 0 : index
    %0 = vector.load %arg7[%c0, %c0_0, %c0_1] : memref<2x8x128xf32, #tpu.memory_space<vmem>>, vector<1x8x128xf32>
    %1 = vector.shape_cast %0 : vector<1x8x128xf32> to vector<8x128xf32>
    %c1 = arith.constant 1 : index
    %c0_2 = arith.constant 0 : index
    %c0_3 = arith.constant 0 : index
    %2 = vector.load %arg7[%c1, %c0_2, %c0_3] : memref<2x8x128xf32, #tpu.memory_space<vmem>>, vector<1x8x128xf32>
    %3 = vector.shape_cast %2 : vector<1x8x128xf32> to vector<8x128xf32>
    %c0_4 = arith.constant 0 : index
    %4 = memref.load %arg1[%c0_4] : memref<16xf32, #tpu.memory_space<smem>>
    %5 = vector.broadcast %4 : f32 to vector<8x128xf32>
    %6 = arith.mulf %1, %5 : vector<8x128xf32>
    %c8 = arith.constant 8 : index
    %7 = memref.load %arg1[%c8] : memref<16xf32, #tpu.memory_space<smem>>
    %8 = vector.broadcast %7 : f32 to vector<8x128xf32>
    %9 = arith.mulf %3, %8 : vector<8x128xf32>
    %10 = arith.addf %6, %9 : vector<8x128xf32>
    %c0_5 = arith.constant 0 : index
    %11 = memref.load %arg2[%c0_5] : memref<8xf32, #tpu.memory_space<smem>>
    %12 = vector.broadcast %11 : f32 to vector<8x128xf32>
    %13 = arith.addf %10, %12 : vector<8x128xf32>
    %cst = arith.constant 0.000000e+00 : f32
    %14 = vector.broadcast %cst : f32 to vector<8x128xf32>
    %15 = arith.maximumf %13, %14 : vector<8x128xf32>
    %c1_6 = arith.constant 1 : index
    %16 = memref.load %arg1[%c1_6] : memref<16xf32, #tpu.memory_space<smem>>
    %17 = vector.broadcast %16 : f32 to vector<8x128xf32>
    %18 = arith.mulf %1, %17 : vector<8x128xf32>
    %c9 = arith.constant 9 : index
    %19 = memref.load %arg1[%c9] : memref<16xf32, #tpu.memory_space<smem>>
    %20 = vector.broadcast %19 : f32 to vector<8x128xf32>
    %21 = arith.mulf %3, %20 : vector<8x128xf32>
    %22 = arith.addf %18, %21 : vector<8x128xf32>
    %c1_7 = arith.constant 1 : index
    %23 = memref.load %arg2[%c1_7] : memref<8xf32, #tpu.memory_space<smem>>
    %24 = vector.broadcast %23 : f32 to vector<8x128xf32>
    %25 = arith.addf %22, %24 : vector<8x128xf32>
    %cst_8 = arith.constant 0.000000e+00 : f32
    %26 = vector.broadcast %cst_8 : f32 to vector<8x128xf32>
    %27 = arith.maximumf %25, %26 : vector<8x128xf32>
    %c2 = arith.constant 2 : index
    %28 = memref.load %arg1[%c2] : memref<16xf32, #tpu.memory_space<smem>>
    %29 = vector.broadcast %28 : f32 to vector<8x128xf32>
    %30 = arith.mulf %1, %29 : vector<8x128xf32>
    %c10 = arith.constant 10 : index
    %31 = memref.load %arg1[%c10] : memref<16xf32, #tpu.memory_space<smem>>
    %32 = vector.broadcast %31 : f32 to vector<8x128xf32>
    %33 = arith.mulf %3, %32 : vector<8x128xf32>
    %34 = arith.addf %30, %33 : vector<8x128xf32>
    %c2_9 = arith.constant 2 : index
    %35 = memref.load %arg2[%c2_9] : memref<8xf32, #tpu.memory_space<smem>>
    %36 = vector.broadcast %35 : f32 to vector<8x128xf32>
    %37 = arith.addf %34, %36 : vector<8x128xf32>
    %cst_10 = arith.constant 0.000000e+00 : f32
    %38 = vector.broadcast %cst_10 : f32 to vector<8x128xf32>
    %39 = arith.maximumf %37, %38 : vector<8x128xf32>
    %c3 = arith.constant 3 : index
    %40 = memref.load %arg1[%c3] : memref<16xf32, #tpu.memory_space<smem>>
    %41 = vector.broadcast %40 : f32 to vector<8x128xf32>
    %42 = arith.mulf %1, %41 : vector<8x128xf32>
    %c11 = arith.constant 11 : index
    %43 = memref.load %arg1[%c11] : memref<16xf32, #tpu.memory_space<smem>>
    %44 = vector.broadcast %43 : f32 to vector<8x128xf32>
    %45 = arith.mulf %3, %44 : vector<8x128xf32>
    %46 = arith.addf %42, %45 : vector<8x128xf32>
    %c3_11 = arith.constant 3 : index
    %47 = memref.load %arg2[%c3_11] : memref<8xf32, #tpu.memory_space<smem>>
    %48 = vector.broadcast %47 : f32 to vector<8x128xf32>
    %49 = arith.addf %46, %48 : vector<8x128xf32>
    %cst_12 = arith.constant 0.000000e+00 : f32
    %50 = vector.broadcast %cst_12 : f32 to vector<8x128xf32>
    %51 = arith.maximumf %49, %50 : vector<8x128xf32>
    %c4 = arith.constant 4 : index
    %52 = memref.load %arg1[%c4] : memref<16xf32, #tpu.memory_space<smem>>
    %53 = vector.broadcast %52 : f32 to vector<8x128xf32>
    %54 = arith.mulf %1, %53 : vector<8x128xf32>
    %c12 = arith.constant 12 : index
    %55 = memref.load %arg1[%c12] : memref<16xf32, #tpu.memory_space<smem>>
    %56 = vector.broadcast %55 : f32 to vector<8x128xf32>
    %57 = arith.mulf %3, %56 : vector<8x128xf32>
    %58 = arith.addf %54, %57 : vector<8x128xf32>
    %c4_13 = arith.constant 4 : index
    %59 = memref.load %arg2[%c4_13] : memref<8xf32, #tpu.memory_space<smem>>
    %60 = vector.broadcast %59 : f32 to vector<8x128xf32>
    %61 = arith.addf %58, %60 : vector<8x128xf32>
    %cst_14 = arith.constant 0.000000e+00 : f32
    %62 = vector.broadcast %cst_14 : f32 to vector<8x128xf32>
    %63 = arith.maximumf %61, %62 : vector<8x128xf32>
    %c5 = arith.constant 5 : index
    %64 = memref.load %arg1[%c5] : memref<16xf32, #tpu.memory_space<smem>>
    %65 = vector.broadcast %64 : f32 to vector<8x128xf32>
    %66 = arith.mulf %1, %65 : vector<8x128xf32>
    %c13 = arith.constant 13 : index
    %67 = memref.load %arg1[%c13] : memref<16xf32, #tpu.memory_space<smem>>
    %68 = vector.broadcast %67 : f32 to vector<8x128xf32>
    %69 = arith.mulf %3, %68 : vector<8x128xf32>
    %70 = arith.addf %66, %69 : vector<8x128xf32>
    %c5_15 = arith.constant 5 : index
    %71 = memref.load %arg2[%c5_15] : memref<8xf32, #tpu.memory_space<smem>>
    %72 = vector.broadcast %71 : f32 to vector<8x128xf32>
    %73 = arith.addf %70, %72 : vector<8x128xf32>
    %cst_16 = arith.constant 0.000000e+00 : f32
    %74 = vector.broadcast %cst_16 : f32 to vector<8x128xf32>
    %75 = arith.maximumf %73, %74 : vector<8x128xf32>
    %c6 = arith.constant 6 : index
    %76 = memref.load %arg1[%c6] : memref<16xf32, #tpu.memory_space<smem>>
    %77 = vector.broadcast %76 : f32 to vector<8x128xf32>
    %78 = arith.mulf %1, %77 : vector<8x128xf32>
    %c14 = arith.constant 14 : index
    %79 = memref.load %arg1[%c14] : memref<16xf32, #tpu.memory_space<smem>>
    %80 = vector.broadcast %79 : f32 to vector<8x128xf32>
    %81 = arith.mulf %3, %80 : vector<8x128xf32>
    %82 = arith.addf %78, %81 : vector<8x128xf32>
    %c6_17 = arith.constant 6 : index
    %83 = memref.load %arg2[%c6_17] : memref<8xf32, #tpu.memory_space<smem>>
    %84 = vector.broadcast %83 : f32 to vector<8x128xf32>
    %85 = arith.addf %82, %84 : vector<8x128xf32>
    %cst_18 = arith.constant 0.000000e+00 : f32
    %86 = vector.broadcast %cst_18 : f32 to vector<8x128xf32>
    %87 = arith.maximumf %85, %86 : vector<8x128xf32>
    %c7 = arith.constant 7 : index
    %88 = memref.load %arg1[%c7] : memref<16xf32, #tpu.memory_space<smem>>
    %89 = vector.broadcast %88 : f32 to vector<8x128xf32>
    %90 = arith.mulf %1, %89 : vector<8x128xf32>
    %c15 = arith.constant 15 : index
    %91 = memref.load %arg1[%c15] : memref<16xf32, #tpu.memory_space<smem>>
    %92 = vector.broadcast %91 : f32 to vector<8x128xf32>
    %93 = arith.mulf %3, %92 : vector<8x128xf32>
    %94 = arith.addf %90, %93 : vector<8x128xf32>
    %c7_19 = arith.constant 7 : index
    %95 = memref.load %arg2[%c7_19] : memref<8xf32, #tpu.memory_space<smem>>
    %96 = vector.broadcast %95 : f32 to vector<8x128xf32>
    %97 = arith.addf %94, %96 : vector<8x128xf32>
    %cst_20 = arith.constant 0.000000e+00 : f32
    %98 = vector.broadcast %cst_20 : f32 to vector<8x128xf32>
    %99 = arith.maximumf %97, %98 : vector<8x128xf32>
    %c0_21 = arith.constant 0 : index
    %100 = memref.load %arg3[%c0_21] : memref<64xf32, #tpu.memory_space<smem>>
    %101 = vector.broadcast %100 : f32 to vector<8x128xf32>
    %102 = arith.mulf %15, %101 : vector<8x128xf32>
    %c8_22 = arith.constant 8 : index
    %103 = memref.load %arg3[%c8_22] : memref<64xf32, #tpu.memory_space<smem>>
    %104 = vector.broadcast %103 : f32 to vector<8x128xf32>
    %105 = arith.mulf %27, %104 : vector<8x128xf32>
    %106 = arith.addf %102, %105 : vector<8x128xf32>
    %c16 = arith.constant 16 : index
    %107 = memref.load %arg3[%c16] : memref<64xf32, #tpu.memory_space<smem>>
    %108 = vector.broadcast %107 : f32 to vector<8x128xf32>
    %109 = arith.mulf %39, %108 : vector<8x128xf32>
    %110 = arith.addf %106, %109 : vector<8x128xf32>
    %c24 = arith.constant 24 : index
    %111 = memref.load %arg3[%c24] : memref<64xf32, #tpu.memory_space<smem>>
    %112 = vector.broadcast %111 : f32 to vector<8x128xf32>
    %113 = arith.mulf %51, %112 : vector<8x128xf32>
    %114 = arith.addf %110, %113 : vector<8x128xf32>
    %c32 = arith.constant 32 : index
    %115 = memref.load %arg3[%c32] : memref<64xf32, #tpu.memory_space<smem>>
    %116 = vector.broadcast %115 : f32 to vector<8x128xf32>
    %117 = arith.mulf %63, %116 : vector<8x128xf32>
    %118 = arith.addf %114, %117 : vector<8x128xf32>
    %c40 = arith.constant 40 : index
    %119 = memref.load %arg3[%c40] : memref<64xf32, #tpu.memory_space<smem>>
    %120 = vector.broadcast %119 : f32 to vector<8x128xf32>
    %121 = arith.mulf %75, %120 : vector<8x128xf32>
    %122 = arith.addf %118, %121 : vector<8x128xf32>
    %c48 = arith.constant 48 : index
    %123 = memref.load %arg3[%c48] : memref<64xf32, #tpu.memory_space<smem>>
    %124 = vector.broadcast %123 : f32 to vector<8x128xf32>
    %125 = arith.mulf %87, %124 : vector<8x128xf32>
    %126 = arith.addf %122, %125 : vector<8x128xf32>
    %c56 = arith.constant 56 : index
    %127 = memref.load %arg3[%c56] : memref<64xf32, #tpu.memory_space<smem>>
    %128 = vector.broadcast %127 : f32 to vector<8x128xf32>
    %129 = arith.mulf %99, %128 : vector<8x128xf32>
    %130 = arith.addf %126, %129 : vector<8x128xf32>
    %c0_23 = arith.constant 0 : index
    %131 = memref.load %arg4[%c0_23] : memref<8xf32, #tpu.memory_space<smem>>
    %132 = vector.broadcast %131 : f32 to vector<8x128xf32>
    %133 = arith.addf %130, %132 : vector<8x128xf32>
    %cst_24 = arith.constant 0.000000e+00 : f32
    %134 = vector.broadcast %cst_24 : f32 to vector<8x128xf32>
    %135 = arith.maximumf %133, %134 : vector<8x128xf32>
    %c1_25 = arith.constant 1 : index
    %136 = memref.load %arg3[%c1_25] : memref<64xf32, #tpu.memory_space<smem>>
    %137 = vector.broadcast %136 : f32 to vector<8x128xf32>
    %138 = arith.mulf %15, %137 : vector<8x128xf32>
    %c9_26 = arith.constant 9 : index
    %139 = memref.load %arg3[%c9_26] : memref<64xf32, #tpu.memory_space<smem>>
    %140 = vector.broadcast %139 : f32 to vector<8x128xf32>
    %141 = arith.mulf %27, %140 : vector<8x128xf32>
    %142 = arith.addf %138, %141 : vector<8x128xf32>
    %c17 = arith.constant 17 : index
    %143 = memref.load %arg3[%c17] : memref<64xf32, #tpu.memory_space<smem>>
    %144 = vector.broadcast %143 : f32 to vector<8x128xf32>
    %145 = arith.mulf %39, %144 : vector<8x128xf32>
    %146 = arith.addf %142, %145 : vector<8x128xf32>
    %c25 = arith.constant 25 : index
    %147 = memref.load %arg3[%c25] : memref<64xf32, #tpu.memory_space<smem>>
    %148 = vector.broadcast %147 : f32 to vector<8x128xf32>
    %149 = arith.mulf %51, %148 : vector<8x128xf32>
    %150 = arith.addf %146, %149 : vector<8x128xf32>
    %c33 = arith.constant 33 : index
    %151 = memref.load %arg3[%c33] : memref<64xf32, #tpu.memory_space<smem>>
    %152 = vector.broadcast %151 : f32 to vector<8x128xf32>
    %153 = arith.mulf %63, %152 : vector<8x128xf32>
    %154 = arith.addf %150, %153 : vector<8x128xf32>
    %c41 = arith.constant 41 : index
    %155 = memref.load %arg3[%c41] : memref<64xf32, #tpu.memory_space<smem>>
    %156 = vector.broadcast %155 : f32 to vector<8x128xf32>
    %157 = arith.mulf %75, %156 : vector<8x128xf32>
    %158 = arith.addf %154, %157 : vector<8x128xf32>
    %c49 = arith.constant 49 : index
    %159 = memref.load %arg3[%c49] : memref<64xf32, #tpu.memory_space<smem>>
    %160 = vector.broadcast %159 : f32 to vector<8x128xf32>
    %161 = arith.mulf %87, %160 : vector<8x128xf32>
    %162 = arith.addf %158, %161 : vector<8x128xf32>
    %c57 = arith.constant 57 : index
    %163 = memref.load %arg3[%c57] : memref<64xf32, #tpu.memory_space<smem>>
    %164 = vector.broadcast %163 : f32 to vector<8x128xf32>
    %165 = arith.mulf %99, %164 : vector<8x128xf32>
    %166 = arith.addf %162, %165 : vector<8x128xf32>
    %c1_27 = arith.constant 1 : index
    %167 = memref.load %arg4[%c1_27] : memref<8xf32, #tpu.memory_space<smem>>
    %168 = vector.broadcast %167 : f32 to vector<8x128xf32>
    %169 = arith.addf %166, %168 : vector<8x128xf32>
    %cst_28 = arith.constant 0.000000e+00 : f32
    %170 = vector.broadcast %cst_28 : f32 to vector<8x128xf32>
    %171 = arith.maximumf %169, %170 : vector<8x128xf32>
    %c2_29 = arith.constant 2 : index
    %172 = memref.load %arg3[%c2_29] : memref<64xf32, #tpu.memory_space<smem>>
    %173 = vector.broadcast %172 : f32 to vector<8x128xf32>
    %174 = arith.mulf %15, %173 : vector<8x128xf32>
    %c10_30 = arith.constant 10 : index
    %175 = memref.load %arg3[%c10_30] : memref<64xf32, #tpu.memory_space<smem>>
    %176 = vector.broadcast %175 : f32 to vector<8x128xf32>
    %177 = arith.mulf %27, %176 : vector<8x128xf32>
    %178 = arith.addf %174, %177 : vector<8x128xf32>
    %c18 = arith.constant 18 : index
    %179 = memref.load %arg3[%c18] : memref<64xf32, #tpu.memory_space<smem>>
    %180 = vector.broadcast %179 : f32 to vector<8x128xf32>
    %181 = arith.mulf %39, %180 : vector<8x128xf32>
    %182 = arith.addf %178, %181 : vector<8x128xf32>
    %c26 = arith.constant 26 : index
    %183 = memref.load %arg3[%c26] : memref<64xf32, #tpu.memory_space<smem>>
    %184 = vector.broadcast %183 : f32 to vector<8x128xf32>
    %185 = arith.mulf %51, %184 : vector<8x128xf32>
    %186 = arith.addf %182, %185 : vector<8x128xf32>
    %c34 = arith.constant 34 : index
    %187 = memref.load %arg3[%c34] : memref<64xf32, #tpu.memory_space<smem>>
    %188 = vector.broadcast %187 : f32 to vector<8x128xf32>
    %189 = arith.mulf %63, %188 : vector<8x128xf32>
    %190 = arith.addf %186, %189 : vector<8x128xf32>
    %c42 = arith.constant 42 : index
    %191 = memref.load %arg3[%c42] : memref<64xf32, #tpu.memory_space<smem>>
    %192 = vector.broadcast %191 : f32 to vector<8x128xf32>
    %193 = arith.mulf %75, %192 : vector<8x128xf32>
    %194 = arith.addf %190, %193 : vector<8x128xf32>
    %c50 = arith.constant 50 : index
    %195 = memref.load %arg3[%c50] : memref<64xf32, #tpu.memory_space<smem>>
    %196 = vector.broadcast %195 : f32 to vector<8x128xf32>
    %197 = arith.mulf %87, %196 : vector<8x128xf32>
    %198 = arith.addf %194, %197 : vector<8x128xf32>
    %c58 = arith.constant 58 : index
    %199 = memref.load %arg3[%c58] : memref<64xf32, #tpu.memory_space<smem>>
    %200 = vector.broadcast %199 : f32 to vector<8x128xf32>
    %201 = arith.mulf %99, %200 : vector<8x128xf32>
    %202 = arith.addf %198, %201 : vector<8x128xf32>
    %c2_31 = arith.constant 2 : index
    %203 = memref.load %arg4[%c2_31] : memref<8xf32, #tpu.memory_space<smem>>
    %204 = vector.broadcast %203 : f32 to vector<8x128xf32>
    %205 = arith.addf %202, %204 : vector<8x128xf32>
    %cst_32 = arith.constant 0.000000e+00 : f32
    %206 = vector.broadcast %cst_32 : f32 to vector<8x128xf32>
    %207 = arith.maximumf %205, %206 : vector<8x128xf32>
    %c3_33 = arith.constant 3 : index
    %208 = memref.load %arg3[%c3_33] : memref<64xf32, #tpu.memory_space<smem>>
    %209 = vector.broadcast %208 : f32 to vector<8x128xf32>
    %210 = arith.mulf %15, %209 : vector<8x128xf32>
    %c11_34 = arith.constant 11 : index
    %211 = memref.load %arg3[%c11_34] : memref<64xf32, #tpu.memory_space<smem>>
    %212 = vector.broadcast %211 : f32 to vector<8x128xf32>
    %213 = arith.mulf %27, %212 : vector<8x128xf32>
    %214 = arith.addf %210, %213 : vector<8x128xf32>
    %c19 = arith.constant 19 : index
    %215 = memref.load %arg3[%c19] : memref<64xf32, #tpu.memory_space<smem>>
    %216 = vector.broadcast %215 : f32 to vector<8x128xf32>
    %217 = arith.mulf %39, %216 : vector<8x128xf32>
    %218 = arith.addf %214, %217 : vector<8x128xf32>
    %c27 = arith.constant 27 : index
    %219 = memref.load %arg3[%c27] : memref<64xf32, #tpu.memory_space<smem>>
    %220 = vector.broadcast %219 : f32 to vector<8x128xf32>
    %221 = arith.mulf %51, %220 : vector<8x128xf32>
    %222 = arith.addf %218, %221 : vector<8x128xf32>
    %c35 = arith.constant 35 : index
    %223 = memref.load %arg3[%c35] : memref<64xf32, #tpu.memory_space<smem>>
    %224 = vector.broadcast %223 : f32 to vector<8x128xf32>
    %225 = arith.mulf %63, %224 : vector<8x128xf32>
    %226 = arith.addf %222, %225 : vector<8x128xf32>
    %c43 = arith.constant 43 : index
    %227 = memref.load %arg3[%c43] : memref<64xf32, #tpu.memory_space<smem>>
    %228 = vector.broadcast %227 : f32 to vector<8x128xf32>
    %229 = arith.mulf %75, %228 : vector<8x128xf32>
    %230 = arith.addf %226, %229 : vector<8x128xf32>
    %c51 = arith.constant 51 : index
    %231 = memref.load %arg3[%c51] : memref<64xf32, #tpu.memory_space<smem>>
    %232 = vector.broadcast %231 : f32 to vector<8x128xf32>
    %233 = arith.mulf %87, %232 : vector<8x128xf32>
    %234 = arith.addf %230, %233 : vector<8x128xf32>
    %c59 = arith.constant 59 : index
    %235 = memref.load %arg3[%c59] : memref<64xf32, #tpu.memory_space<smem>>
    %236 = vector.broadcast %235 : f32 to vector<8x128xf32>
    %237 = arith.mulf %99, %236 : vector<8x128xf32>
    %238 = arith.addf %234, %237 : vector<8x128xf32>
    %c3_35 = arith.constant 3 : index
    %239 = memref.load %arg4[%c3_35] : memref<8xf32, #tpu.memory_space<smem>>
    %240 = vector.broadcast %239 : f32 to vector<8x128xf32>
    %241 = arith.addf %238, %240 : vector<8x128xf32>
    %cst_36 = arith.constant 0.000000e+00 : f32
    %242 = vector.broadcast %cst_36 : f32 to vector<8x128xf32>
    %243 = arith.maximumf %241, %242 : vector<8x128xf32>
    %c4_37 = arith.constant 4 : index
    %244 = memref.load %arg3[%c4_37] : memref<64xf32, #tpu.memory_space<smem>>
    %245 = vector.broadcast %244 : f32 to vector<8x128xf32>
    %246 = arith.mulf %15, %245 : vector<8x128xf32>
    %c12_38 = arith.constant 12 : index
    %247 = memref.load %arg3[%c12_38] : memref<64xf32, #tpu.memory_space<smem>>
    %248 = vector.broadcast %247 : f32 to vector<8x128xf32>
    %249 = arith.mulf %27, %248 : vector<8x128xf32>
    %250 = arith.addf %246, %249 : vector<8x128xf32>
    %c20 = arith.constant 20 : index
    %251 = memref.load %arg3[%c20] : memref<64xf32, #tpu.memory_space<smem>>
    %252 = vector.broadcast %251 : f32 to vector<8x128xf32>
    %253 = arith.mulf %39, %252 : vector<8x128xf32>
    %254 = arith.addf %250, %253 : vector<8x128xf32>
    %c28 = arith.constant 28 : index
    %255 = memref.load %arg3[%c28] : memref<64xf32, #tpu.memory_space<smem>>
    %256 = vector.broadcast %255 : f32 to vector<8x128xf32>
    %257 = arith.mulf %51, %256 : vector<8x128xf32>
    %258 = arith.addf %254, %257 : vector<8x128xf32>
    %c36 = arith.constant 36 : index
    %259 = memref.load %arg3[%c36] : memref<64xf32, #tpu.memory_space<smem>>
    %260 = vector.broadcast %259 : f32 to vector<8x128xf32>
    %261 = arith.mulf %63, %260 : vector<8x128xf32>
    %262 = arith.addf %258, %261 : vector<8x128xf32>
    %c44 = arith.constant 44 : index
    %263 = memref.load %arg3[%c44] : memref<64xf32, #tpu.memory_space<smem>>
    %264 = vector.broadcast %263 : f32 to vector<8x128xf32>
    %265 = arith.mulf %75, %264 : vector<8x128xf32>
    %266 = arith.addf %262, %265 : vector<8x128xf32>
    %c52 = arith.constant 52 : index
    %267 = memref.load %arg3[%c52] : memref<64xf32, #tpu.memory_space<smem>>
    %268 = vector.broadcast %267 : f32 to vector<8x128xf32>
    %269 = arith.mulf %87, %268 : vector<8x128xf32>
    %270 = arith.addf %266, %269 : vector<8x128xf32>
    %c60 = arith.constant 60 : index
    %271 = memref.load %arg3[%c60] : memref<64xf32, #tpu.memory_space<smem>>
    %272 = vector.broadcast %271 : f32 to vector<8x128xf32>
    %273 = arith.mulf %99, %272 : vector<8x128xf32>
    %274 = arith.addf %270, %273 : vector<8x128xf32>
    %c4_39 = arith.constant 4 : index
    %275 = memref.load %arg4[%c4_39] : memref<8xf32, #tpu.memory_space<smem>>
    %276 = vector.broadcast %275 : f32 to vector<8x128xf32>
    %277 = arith.addf %274, %276 : vector<8x128xf32>
    %cst_40 = arith.constant 0.000000e+00 : f32
    %278 = vector.broadcast %cst_40 : f32 to vector<8x128xf32>
    %279 = arith.maximumf %277, %278 : vector<8x128xf32>
    %c5_41 = arith.constant 5 : index
    %280 = memref.load %arg3[%c5_41] : memref<64xf32, #tpu.memory_space<smem>>
    %281 = vector.broadcast %280 : f32 to vector<8x128xf32>
    %282 = arith.mulf %15, %281 : vector<8x128xf32>
    %c13_42 = arith.constant 13 : index
    %283 = memref.load %arg3[%c13_42] : memref<64xf32, #tpu.memory_space<smem>>
    %284 = vector.broadcast %283 : f32 to vector<8x128xf32>
    %285 = arith.mulf %27, %284 : vector<8x128xf32>
    %286 = arith.addf %282, %285 : vector<8x128xf32>
    %c21 = arith.constant 21 : index
    %287 = memref.load %arg3[%c21] : memref<64xf32, #tpu.memory_space<smem>>
    %288 = vector.broadcast %287 : f32 to vector<8x128xf32>
    %289 = arith.mulf %39, %288 : vector<8x128xf32>
    %290 = arith.addf %286, %289 : vector<8x128xf32>
    %c29 = arith.constant 29 : index
    %291 = memref.load %arg3[%c29] : memref<64xf32, #tpu.memory_space<smem>>
    %292 = vector.broadcast %291 : f32 to vector<8x128xf32>
    %293 = arith.mulf %51, %292 : vector<8x128xf32>
    %294 = arith.addf %290, %293 : vector<8x128xf32>
    %c37 = arith.constant 37 : index
    %295 = memref.load %arg3[%c37] : memref<64xf32, #tpu.memory_space<smem>>
    %296 = vector.broadcast %295 : f32 to vector<8x128xf32>
    %297 = arith.mulf %63, %296 : vector<8x128xf32>
    %298 = arith.addf %294, %297 : vector<8x128xf32>
    %c45 = arith.constant 45 : index
    %299 = memref.load %arg3[%c45] : memref<64xf32, #tpu.memory_space<smem>>
    %300 = vector.broadcast %299 : f32 to vector<8x128xf32>
    %301 = arith.mulf %75, %300 : vector<8x128xf32>
    %302 = arith.addf %298, %301 : vector<8x128xf32>
    %c53 = arith.constant 53 : index
    %303 = memref.load %arg3[%c53] : memref<64xf32, #tpu.memory_space<smem>>
    %304 = vector.broadcast %303 : f32 to vector<8x128xf32>
    %305 = arith.mulf %87, %304 : vector<8x128xf32>
    %306 = arith.addf %302, %305 : vector<8x128xf32>
    %c61 = arith.constant 61 : index
    %307 = memref.load %arg3[%c61] : memref<64xf32, #tpu.memory_space<smem>>
    %308 = vector.broadcast %307 : f32 to vector<8x128xf32>
    %309 = arith.mulf %99, %308 : vector<8x128xf32>
    %310 = arith.addf %306, %309 : vector<8x128xf32>
    %c5_43 = arith.constant 5 : index
    %311 = memref.load %arg4[%c5_43] : memref<8xf32, #tpu.memory_space<smem>>
    %312 = vector.broadcast %311 : f32 to vector<8x128xf32>
    %313 = arith.addf %310, %312 : vector<8x128xf32>
    %cst_44 = arith.constant 0.000000e+00 : f32
    %314 = vector.broadcast %cst_44 : f32 to vector<8x128xf32>
    %315 = arith.maximumf %313, %314 : vector<8x128xf32>
    %c6_45 = arith.constant 6 : index
    %316 = memref.load %arg3[%c6_45] : memref<64xf32, #tpu.memory_space<smem>>
    %317 = vector.broadcast %316 : f32 to vector<8x128xf32>
    %318 = arith.mulf %15, %317 : vector<8x128xf32>
    %c14_46 = arith.constant 14 : index
    %319 = memref.load %arg3[%c14_46] : memref<64xf32, #tpu.memory_space<smem>>
    %320 = vector.broadcast %319 : f32 to vector<8x128xf32>
    %321 = arith.mulf %27, %320 : vector<8x128xf32>
    %322 = arith.addf %318, %321 : vector<8x128xf32>
    %c22 = arith.constant 22 : index
    %323 = memref.load %arg3[%c22] : memref<64xf32, #tpu.memory_space<smem>>
    %324 = vector.broadcast %323 : f32 to vector<8x128xf32>
    %325 = arith.mulf %39, %324 : vector<8x128xf32>
    %326 = arith.addf %322, %325 : vector<8x128xf32>
    %c30 = arith.constant 30 : index
    %327 = memref.load %arg3[%c30] : memref<64xf32, #tpu.memory_space<smem>>
    %328 = vector.broadcast %327 : f32 to vector<8x128xf32>
    %329 = arith.mulf %51, %328 : vector<8x128xf32>
    %330 = arith.addf %326, %329 : vector<8x128xf32>
    %c38 = arith.constant 38 : index
    %331 = memref.load %arg3[%c38] : memref<64xf32, #tpu.memory_space<smem>>
    %332 = vector.broadcast %331 : f32 to vector<8x128xf32>
    %333 = arith.mulf %63, %332 : vector<8x128xf32>
    %334 = arith.addf %330, %333 : vector<8x128xf32>
    %c46 = arith.constant 46 : index
    %335 = memref.load %arg3[%c46] : memref<64xf32, #tpu.memory_space<smem>>
    %336 = vector.broadcast %335 : f32 to vector<8x128xf32>
    %337 = arith.mulf %75, %336 : vector<8x128xf32>
    %338 = arith.addf %334, %337 : vector<8x128xf32>
    %c54 = arith.constant 54 : index
    %339 = memref.load %arg3[%c54] : memref<64xf32, #tpu.memory_space<smem>>
    %340 = vector.broadcast %339 : f32 to vector<8x128xf32>
    %341 = arith.mulf %87, %340 : vector<8x128xf32>
    %342 = arith.addf %338, %341 : vector<8x128xf32>
    %c62 = arith.constant 62 : index
    %343 = memref.load %arg3[%c62] : memref<64xf32, #tpu.memory_space<smem>>
    %344 = vector.broadcast %343 : f32 to vector<8x128xf32>
    %345 = arith.mulf %99, %344 : vector<8x128xf32>
    %346 = arith.addf %342, %345 : vector<8x128xf32>
    %c6_47 = arith.constant 6 : index
    %347 = memref.load %arg4[%c6_47] : memref<8xf32, #tpu.memory_space<smem>>
    %348 = vector.broadcast %347 : f32 to vector<8x128xf32>
    %349 = arith.addf %346, %348 : vector<8x128xf32>
    %cst_48 = arith.constant 0.000000e+00 : f32
    %350 = vector.broadcast %cst_48 : f32 to vector<8x128xf32>
    %351 = arith.maximumf %349, %350 : vector<8x128xf32>
    %c7_49 = arith.constant 7 : index
    %352 = memref.load %arg3[%c7_49] : memref<64xf32, #tpu.memory_space<smem>>
    %353 = vector.broadcast %352 : f32 to vector<8x128xf32>
    %354 = arith.mulf %15, %353 : vector<8x128xf32>
    %c15_50 = arith.constant 15 : index
    %355 = memref.load %arg3[%c15_50] : memref<64xf32, #tpu.memory_space<smem>>
    %356 = vector.broadcast %355 : f32 to vector<8x128xf32>
    %357 = arith.mulf %27, %356 : vector<8x128xf32>
    %358 = arith.addf %354, %357 : vector<8x128xf32>
    %c23 = arith.constant 23 : index
    %359 = memref.load %arg3[%c23] : memref<64xf32, #tpu.memory_space<smem>>
    %360 = vector.broadcast %359 : f32 to vector<8x128xf32>
    %361 = arith.mulf %39, %360 : vector<8x128xf32>
    %362 = arith.addf %358, %361 : vector<8x128xf32>
    %c31 = arith.constant 31 : index
    %363 = memref.load %arg3[%c31] : memref<64xf32, #tpu.memory_space<smem>>
    %364 = vector.broadcast %363 : f32 to vector<8x128xf32>
    %365 = arith.mulf %51, %364 : vector<8x128xf32>
    %366 = arith.addf %362, %365 : vector<8x128xf32>
    %c39 = arith.constant 39 : index
    %367 = memref.load %arg3[%c39] : memref<64xf32, #tpu.memory_space<smem>>
    %368 = vector.broadcast %367 : f32 to vector<8x128xf32>
    %369 = arith.mulf %63, %368 : vector<8x128xf32>
    %370 = arith.addf %366, %369 : vector<8x128xf32>
    %c47 = arith.constant 47 : index
    %371 = memref.load %arg3[%c47] : memref<64xf32, #tpu.memory_space<smem>>
    %372 = vector.broadcast %371 : f32 to vector<8x128xf32>
    %373 = arith.mulf %75, %372 : vector<8x128xf32>
    %374 = arith.addf %370, %373 : vector<8x128xf32>
    %c55 = arith.constant 55 : index
    %375 = memref.load %arg3[%c55] : memref<64xf32, #tpu.memory_space<smem>>
    %376 = vector.broadcast %375 : f32 to vector<8x128xf32>
    %377 = arith.mulf %87, %376 : vector<8x128xf32>
    %378 = arith.addf %374, %377 : vector<8x128xf32>
    %c63 = arith.constant 63 : index
    %379 = memref.load %arg3[%c63] : memref<64xf32, #tpu.memory_space<smem>>
    %380 = vector.broadcast %379 : f32 to vector<8x128xf32>
    %381 = arith.mulf %99, %380 : vector<8x128xf32>
    %382 = arith.addf %378, %381 : vector<8x128xf32>
    %c7_51 = arith.constant 7 : index
    %383 = memref.load %arg4[%c7_51] : memref<8xf32, #tpu.memory_space<smem>>
    %384 = vector.broadcast %383 : f32 to vector<8x128xf32>
    %385 = arith.addf %382, %384 : vector<8x128xf32>
    %cst_52 = arith.constant 0.000000e+00 : f32
    %386 = vector.broadcast %cst_52 : f32 to vector<8x128xf32>
    %387 = arith.maximumf %385, %386 : vector<8x128xf32>
    %c0_53 = arith.constant 0 : index
    %388 = memref.load %arg5[%c0_53] : memref<24xf32, #tpu.memory_space<smem>>
    %389 = vector.broadcast %388 : f32 to vector<8x128xf32>
    %390 = arith.mulf %135, %389 : vector<8x128xf32>
    %c3_54 = arith.constant 3 : index
    %391 = memref.load %arg5[%c3_54] : memref<24xf32, #tpu.memory_space<smem>>
    %392 = vector.broadcast %391 : f32 to vector<8x128xf32>
    %393 = arith.mulf %171, %392 : vector<8x128xf32>
    %394 = arith.addf %390, %393 : vector<8x128xf32>
    %c6_55 = arith.constant 6 : index
    %395 = memref.load %arg5[%c6_55] : memref<24xf32, #tpu.memory_space<smem>>
    %396 = vector.broadcast %395 : f32 to vector<8x128xf32>
    %397 = arith.mulf %207, %396 : vector<8x128xf32>
    %398 = arith.addf %394, %397 : vector<8x128xf32>
    %c9_56 = arith.constant 9 : index
    %399 = memref.load %arg5[%c9_56] : memref<24xf32, #tpu.memory_space<smem>>
    %400 = vector.broadcast %399 : f32 to vector<8x128xf32>
    %401 = arith.mulf %243, %400 : vector<8x128xf32>
    %402 = arith.addf %398, %401 : vector<8x128xf32>
    %c12_57 = arith.constant 12 : index
    %403 = memref.load %arg5[%c12_57] : memref<24xf32, #tpu.memory_space<smem>>
    %404 = vector.broadcast %403 : f32 to vector<8x128xf32>
    %405 = arith.mulf %279, %404 : vector<8x128xf32>
    %406 = arith.addf %402, %405 : vector<8x128xf32>
    %c15_58 = arith.constant 15 : index
    %407 = memref.load %arg5[%c15_58] : memref<24xf32, #tpu.memory_space<smem>>
    %408 = vector.broadcast %407 : f32 to vector<8x128xf32>
    %409 = arith.mulf %315, %408 : vector<8x128xf32>
    %410 = arith.addf %406, %409 : vector<8x128xf32>
    %c18_59 = arith.constant 18 : index
    %411 = memref.load %arg5[%c18_59] : memref<24xf32, #tpu.memory_space<smem>>
    %412 = vector.broadcast %411 : f32 to vector<8x128xf32>
    %413 = arith.mulf %351, %412 : vector<8x128xf32>
    %414 = arith.addf %410, %413 : vector<8x128xf32>
    %c21_60 = arith.constant 21 : index
    %415 = memref.load %arg5[%c21_60] : memref<24xf32, #tpu.memory_space<smem>>
    %416 = vector.broadcast %415 : f32 to vector<8x128xf32>
    %417 = arith.mulf %387, %416 : vector<8x128xf32>
    %418 = arith.addf %414, %417 : vector<8x128xf32>
    %c0_61 = arith.constant 0 : index
    %419 = memref.load %arg6[%c0_61] : memref<3xf32, #tpu.memory_space<smem>>
    %420 = vector.broadcast %419 : f32 to vector<8x128xf32>
    %421 = arith.addf %418, %420 : vector<8x128xf32>
    %c0_62 = arith.constant 0 : index
    %c0_63 = arith.constant 0 : index
    %c0_64 = arith.constant 0 : index
    %422 = vector.load %arg8[%c0_62, %c0_63, %c0_64] : memref<3x8x128xf32, #tpu.memory_space<vmem>>, vector<1x8x128xf32>
    %423 = vector.shape_cast %422 : vector<1x8x128xf32> to vector<8x128xf32>
    %424 = vector.shape_cast %421 : vector<8x128xf32> to vector<1x8x128xf32>
    tpu.vector_store %arg8[%c0_62, %c0_63, %c0_64], %424 {strides = array<i32>} : memref<3x8x128xf32, #tpu.memory_space<vmem>>, vector<1x8x128xf32>,
    %c1_65 = arith.constant 1 : index
    %425 = memref.load %arg5[%c1_65] : memref<24xf32, #tpu.memory_space<smem>>
    %426 = vector.broadcast %425 : f32 to vector<8x128xf32>
    %427 = arith.mulf %135, %426 : vector<8x128xf32>
    %c4_66 = arith.constant 4 : index
    %428 = memref.load %arg5[%c4_66] : memref<24xf32, #tpu.memory_space<smem>>
    %429 = vector.broadcast %428 : f32 to vector<8x128xf32>
    %430 = arith.mulf %171, %429 : vector<8x128xf32>
    %431 = arith.addf %427, %430 : vector<8x128xf32>
    %c7_67 = arith.constant 7 : index
    %432 = memref.load %arg5[%c7_67] : memref<24xf32, #tpu.memory_space<smem>>
    %433 = vector.broadcast %432 : f32 to vector<8x128xf32>
    %434 = arith.mulf %207, %433 : vector<8x128xf32>
    %435 = arith.addf %431, %434 : vector<8x128xf32>
    %c10_68 = arith.constant 10 : index
    %436 = memref.load %arg5[%c10_68] : memref<24xf32, #tpu.memory_space<smem>>
    %437 = vector.broadcast %436 : f32 to vector<8x128xf32>
    %438 = arith.mulf %243, %437 : vector<8x128xf32>
    %439 = arith.addf %435, %438 : vector<8x128xf32>
    %c13_69 = arith.constant 13 : index
    %440 = memref.load %arg5[%c13_69] : memref<24xf32, #tpu.memory_space<smem>>
    %441 = vector.broadcast %440 : f32 to vector<8x128xf32>
    %442 = arith.mulf %279, %441 : vector<8x128xf32>
    %443 = arith.addf %439, %442 : vector<8x128xf32>
    %c16_70 = arith.constant 16 : index
    %444 = memref.load %arg5[%c16_70] : memref<24xf32, #tpu.memory_space<smem>>
    %445 = vector.broadcast %444 : f32 to vector<8x128xf32>
    %446 = arith.mulf %315, %445 : vector<8x128xf32>
    %447 = arith.addf %443, %446 : vector<8x128xf32>
    %c19_71 = arith.constant 19 : index
    %448 = memref.load %arg5[%c19_71] : memref<24xf32, #tpu.memory_space<smem>>
    %449 = vector.broadcast %448 : f32 to vector<8x128xf32>
    %450 = arith.mulf %351, %449 : vector<8x128xf32>
    %451 = arith.addf %447, %450 : vector<8x128xf32>
    %c22_72 = arith.constant 22 : index
    %452 = memref.load %arg5[%c22_72] : memref<24xf32, #tpu.memory_space<smem>>
    %453 = vector.broadcast %452 : f32 to vector<8x128xf32>
    %454 = arith.mulf %387, %453 : vector<8x128xf32>
    %455 = arith.addf %451, %454 : vector<8x128xf32>
    %c1_73 = arith.constant 1 : index
    %456 = memref.load %arg6[%c1_73] : memref<3xf32, #tpu.memory_space<smem>>
    %457 = vector.broadcast %456 : f32 to vector<8x128xf32>
    %458 = arith.addf %455, %457 : vector<8x128xf32>
    %c1_74 = arith.constant 1 : index
    %c0_75 = arith.constant 0 : index
    %c0_76 = arith.constant 0 : index
    %459 = vector.load %arg8[%c1_74, %c0_75, %c0_76] : memref<3x8x128xf32, #tpu.memory_space<vmem>>, vector<1x8x128xf32>
    %460 = vector.shape_cast %459 : vector<1x8x128xf32> to vector<8x128xf32>
    %461 = vector.shape_cast %458 : vector<8x128xf32> to vector<1x8x128xf32>
    tpu.vector_store %arg8[%c1_74, %c0_75, %c0_76], %461 {strides = array<i32>} : memref<3x8x128xf32, #tpu.memory_space<vmem>>, vector<1x8x128xf32>,
    %c2_77 = arith.constant 2 : index
    %462 = memref.load %arg5[%c2_77] : memref<24xf32, #tpu.memory_space<smem>>
    %463 = vector.broadcast %462 : f32 to vector<8x128xf32>
    %464 = arith.mulf %135, %463 : vector<8x128xf32>
    %c5_78 = arith.constant 5 : index
    %465 = memref.load %arg5[%c5_78] : memref<24xf32, #tpu.memory_space<smem>>
    %466 = vector.broadcast %465 : f32 to vector<8x128xf32>
    %467 = arith.mulf %171, %466 : vector<8x128xf32>
    %468 = arith.addf %464, %467 : vector<8x128xf32>
    %c8_79 = arith.constant 8 : index
    %469 = memref.load %arg5[%c8_79] : memref<24xf32, #tpu.memory_space<smem>>
    %470 = vector.broadcast %469 : f32 to vector<8x128xf32>
    %471 = arith.mulf %207, %470 : vector<8x128xf32>
    %472 = arith.addf %468, %471 : vector<8x128xf32>
    %c11_80 = arith.constant 11 : index
    %473 = memref.load %arg5[%c11_80] : memref<24xf32, #tpu.memory_space<smem>>
    %474 = vector.broadcast %473 : f32 to vector<8x128xf32>
    %475 = arith.mulf %243, %474 : vector<8x128xf32>
    %476 = arith.addf %472, %475 : vector<8x128xf32>
    %c14_81 = arith.constant 14 : index
    %477 = memref.load %arg5[%c14_81] : memref<24xf32, #tpu.memory_space<smem>>
    %478 = vector.broadcast %477 : f32 to vector<8x128xf32>
    %479 = arith.mulf %279, %478 : vector<8x128xf32>
    %480 = arith.addf %476, %479 : vector<8x128xf32>
    %c17_82 = arith.constant 17 : index
    %481 = memref.load %arg5[%c17_82] : memref<24xf32, #tpu.memory_space<smem>>
    %482 = vector.broadcast %481 : f32 to vector<8x128xf32>
    %483 = arith.mulf %315, %482 : vector<8x128xf32>
    %484 = arith.addf %480, %483 : vector<8x128xf32>
    %c20_83 = arith.constant 20 : index
    %485 = memref.load %arg5[%c20_83] : memref<24xf32, #tpu.memory_space<smem>>
    %486 = vector.broadcast %485 : f32 to vector<8x128xf32>
    %487 = arith.mulf %351, %486 : vector<8x128xf32>
    %488 = arith.addf %484, %487 : vector<8x128xf32>
    %c23_84 = arith.constant 23 : index
    %489 = memref.load %arg5[%c23_84] : memref<24xf32, #tpu.memory_space<smem>>
    %490 = vector.broadcast %489 : f32 to vector<8x128xf32>
    %491 = arith.mulf %387, %490 : vector<8x128xf32>
    %492 = arith.addf %488, %491 : vector<8x128xf32>
    %c2_85 = arith.constant 2 : index
    %493 = memref.load %arg6[%c2_85] : memref<3xf32, #tpu.memory_space<smem>>
    %494 = vector.broadcast %493 : f32 to vector<8x128xf32>
    %495 = arith.addf %492, %494 : vector<8x128xf32>
    %c2_86 = arith.constant 2 : index
    %c0_87 = arith.constant 0 : index
    %c0_88 = arith.constant 0 : index
    %496 = vector.load %arg8[%c2_86, %c0_87, %c0_88] : memref<3x8x128xf32, #tpu.memory_space<vmem>>, vector<1x8x128xf32>
    %497 = vector.shape_cast %496 : vector<1x8x128xf32> to vector<8x128xf32>
    %498 = vector.shape_cast %495 : vector<8x128xf32> to vector<1x8x128xf32>
    tpu.vector_store %arg8[%c2_86, %c0_87, %c0_88], %498 {strides = array<i32>} : memref<3x8x128xf32, #tpu.memory_space<vmem>>, vector<1x8x128xf32>,
    return
  }
  func.func @transform_0(%arg0: i32) -> i32 {
    %c0_i32 = arith.constant 0 : i32
    %c0_i32_0 = arith.constant 0 : i32
    return %c0_i32 : i32
  }
  func.func @transform_1(%arg0: i32) -> i32 {
    %c0_i32 = arith.constant 0 : i32
    %c0_i32_0 = arith.constant 0 : i32
    return %c0_i32 : i32
  }
  func.func @transform_2(%arg0: i32) -> i32 {
    %c0_i32 = arith.constant 0 : i32
    %c0_i32_0 = arith.constant 0 : i32
    return %c0_i32 : i32
  }
  func.func @transform_3(%arg0: i32) -> i32 {
    %c0_i32 = arith.constant 0 : i32
    %c0_i32_0 = arith.constant 0 : i32
    return %c0_i32 : i32
  }
  func.func @transform_4(%arg0: i32) -> i32 {
    %c0_i32 = arith.constant 0 : i32
    %c0_i32_0 = arith.constant 0 : i32
    return %c0_i32 : i32
  }
  func.func @transform_5(%arg0: i32) -> i32 {
    %c0_i32 = arith.constant 0 : i32
    %c0_i32_0 = arith.constant 0 : i32
    return %c0_i32 : i32
  }
  func.func @transform_6(%arg0: i32) -> (i32, i32, i32) {
    %c0_i32 = arith.constant 0 : i32
    %c0_i32_0 = arith.constant 0 : i32
    %c0_i32_1 = arith.constant 0 : i32
    return %c0_i32, %arg0, %c0_i32_0 : i32, i32, i32
  }
  func.func @transform_7(%arg0: i32) -> (i32, i32, i32) {
    %c0_i32 = arith.constant 0 : i32
    %c0_i32_0 = arith.constant 0 : i32
    %c0_i32_1 = arith.constant 0 : i32
    return %c0_i32, %arg0, %c0_i32_0 : i32, i32, i32
  }
}

</mosaic_0001>

<llo_original>
// kernel: tpu_custom_call.1
$region0: #{tpu_custom_call.1}
  #allocation0 [shape = 'u32[]', space=smem, size = 0x4, offset = 0x4, fixed_abs, tag = 'smem constant byte address 0x4 - core index']
  #allocation1 [shape = 'u32[144,128]{1,0:T(1,128)}', space=vmem, size = 0x12000, scoped, tag = 'internal scratch']
  %s0 = inlined_call_operand.hbm [shape: f32[16], index: 0, kind: input, shape index: {}]
  %s1 = inlined_call_operand.vmem [shape: f32[8], index: 1, kind: input, shape index: {}]
  %s2 = inlined_call_operand.vmem [shape: f32[64], index: 2, kind: input, shape index: {}]
  %s3 = inlined_call_operand.vmem [shape: f32[8], index: 3, kind: input, shape index: {}]
  %s4 = inlined_call_operand.vmem [shape: f32[24], index: 4, kind: input, shape index: {}]
  %s5 = inlined_call_operand.vmem [shape: f32[3], index: 5, kind: input, shape index: {}]
  %s6 = inlined_call_operand.vmem [shape: f32[2,8,128], index: 6, kind: input, shape index: {}]
  %s7 = inlined_call_operand.hbm [shape: f32[3,8,128], index: 7, kind: output, shape index: {}]
  %s8 = sld [smem:[#allocation0]]
  $region62: #{tpu_custom_call.1} parent=0
    _
  %s10 = ssub.s32 1, %s8
  %s11 = scalar_select 0, %s10, %s8
  $region1: #{tpu_custom_call.1} parent=0
    #allocation2 [shape = 'u8[512]{0}', space=smem, size = 0x200, scoped, tag = 'input window, operand 0, single buffered']
    #allocation3 [shape = 's32[1]{0}', space=sflag, size = 0x4, scoped, tag = 'scoped memory for tpu_custom_call.1']
    #allocation4 [shape = 's32[1]{0}', space=sflag, size = 0x4, scoped, tag = 'scoped memory for tpu_custom_call.1']
    #allocation5 [shape = 's32[1]{0}', space=sflag, size = 0x4, scoped, tag = 'scoped memory for tpu_custom_call.1']
    #allocation6 [shape = 'u8[512]{0}', space=smem, size = 0x200, scoped, tag = 'input window, operand 1, single buffered']
    #allocation7 [shape = 'u8[512]{0}', space=smem, size = 0x200, scoped, tag = 'input window, operand 2, single buffered']
    #allocation8 [shape = 's32[1]{0}', space=sflag, size = 0x4, scoped, tag = 'scoped memory for tpu_custom_call.1']
    #allocation9 [shape = 'u8[512]{0}', space=smem, size = 0x200, scoped, tag = 'input window, operand 3, single buffered']
    #allocation10 [shape = 'u8[512]{0}', space=smem, size = 0x200, scoped, tag = 'input window, operand 4, single buffered']
    #allocation11 [shape = 's32[1]{0}', space=sflag, size = 0x4, scoped, tag = 'scoped memory for tpu_custom_call.1']
    #allocation12 [shape = 'u8[512]{0}', space=smem, size = 0x200, scoped, tag = 'input window, operand 5, single buffered']
    #allocation13 [shape = 'u8[12288]{0}', space=vmem, size = 0x3000, scoped, tag = 'output window, operand 0, single buffered']
    %12 = vsyncpa [#allocation4], 0
    %13 = vsyncpa [#allocation5], 0
    %14 = vsyncpa [#allocation8], 0
    %15 = vsyncpa [#allocation11], 0
    %16 = vsyncpa [#allocation3], 0
    // Predicated region
    $region2: #{tpu_custom_call.1} parent=1 // pred_check
      _
    $region3: #{tpu_custom_call.1} parent=1 // pred_check_branch
      %18 = sbr.rel (0) target = $region5
    $region4: #{tpu_custom_call.1} parent=1 // pred_region
      %s20 = ssub.s32 16, 16
      %21 = vsyncadd [#allocation4], %s20
      %24 = dma.hbm_to_smem %s0, 16, [#allocation2], [#allocation4]
    $region5: #{tpu_custom_call.1} parent=1 // pred_fallthru
      _
    // Predicated region
    $region6: #{tpu_custom_call.1} parent=1 // pred_check
      _
    $region7: #{tpu_custom_call.1} parent=1 // pred_check_branch
      %26 = sbr.rel (0) target = $region9
    $region8: #{tpu_custom_call.1} parent=1 // pred_region
      %s28 = ssub.s32 16, 16
      %29 = vsyncadd [#allocation5], %s28
      %s31 = sshll.u32 %s1, 4
      %s32 = int_to_ptr.vmem [resolvable:$true] %s31
      %34 = dma.vmem_to_smem %s32, 16, [#allocation6], [#allocation5]
    $region9: #{tpu_custom_call.1} parent=1 // pred_fallthru
      _
    // Predicated region
    $region10: #{tpu_custom_call.1} parent=1 // pred_check
      _
    $region11: #{tpu_custom_call.1} parent=1 // pred_check_branch
      %36 = sbr.rel (0) target = $region13
    $region12: #{tpu_custom_call.1} parent=1 // pred_region
      %s38 = ssub.s32 16, 16
      %39 = vsyncadd [#allocation8], %s38
      %s41 = sshll.u32 %s2, 4
      %s42 = int_to_ptr.vmem [resolvable:$true] %s41
      %44 = dma.vmem_to_smem %s42, 16, [#allocation7], [#allocation8]
    $region13: #{tpu_custom_call.1} parent=1 // pred_fallthru
      _
    // Predicated region
    $region14: #{tpu_custom_call.1} parent=1 // pred_check
      _
    $region15: #{tpu_custom_call.1} parent=1 // pred_check_branch
      %46 = sbr.rel (0) target = $region17
    $region16: #{tpu_custom_call.1} parent=1 // pred_region
      %s48 = ssub.s32 16, 16
      %49 = vsyncadd [#allocation8], %s48
      %s51 = sshll.u32 %s3, 4
      %s52 = int_to_ptr.vmem [resolvable:$true] %s51
      %54 = dma.vmem_to_smem %s52, 16, [#allocation9], [#allocation8]
    $region17: #{tpu_custom_call.1} parent=1 // pred_fallthru
      _
    // Predicated region
    $region18: #{tpu_custom_call.1} parent=1 // pred_check
      _
    $region19: #{tpu_custom_call.1} parent=1 // pred_check_branch
      %56 = sbr.rel (0) target = $region21
    $region20: #{tpu_custom_call.1} parent=1 // pred_region
      %s58 = ssub.s32 16, 16
      %59 = vsyncadd [#allocation11], %s58
      %s61 = sshll.u32 %s4, 4
      %s62 = int_to_ptr.vmem [resolvable:$true] %s61
      %64 = dma.vmem_to_smem %s62, 16, [#allocation10], [#allocation11]
    $region21: #{tpu_custom_call.1} parent=1 // pred_fallthru
      _
    // Predicated region
    $region22: #{tpu_custom_call.1} parent=1 // pred_check
      _
    $region23: #{tpu_custom_call.1} parent=1 // pred_check_branch
      %66 = sbr.rel (0) target = $region25
    $region24: #{tpu_custom_call.1} parent=1 // pred_region
      %s68 = ssub.s32 16, 16
      %69 = vsyncadd [#allocation11], %s68
      %s71 = sshll.u32 %s5, 4
      %s72 = int_to_ptr.vmem [resolvable:$true] %s71
      %74 = dma.vmem_to_smem %s72, 16, [#allocation12], [#allocation11]
    $region25: #{tpu_custom_call.1} parent=1 // pred_fallthru
      _
    // Predicated region
    $region26: #{tpu_custom_call.1} parent=1 // pred_check
      _
    $region27: #{tpu_custom_call.1} parent=1 // pred_check_branch
      %76 = sbr.rel (0) target = $region29
    $region28: #{tpu_custom_call.1} parent=1 // pred_region
      _
    $region29: #{tpu_custom_call.1} parent=1 // pred_fallthru
      _
    // Predicated region
    $region30: #{tpu_custom_call.1} parent=1 // pred_check
      _
    $region31: #{tpu_custom_call.1} parent=1 // pred_check_branch
      %78 = sbr.rel (0) target = $region33
    $region32: #{tpu_custom_call.1} parent=1 // pred_region
      %79 = dma.done [#allocation4], 16
    $region33: #{tpu_custom_call.1} parent=1 // pred_fallthru
      _
    // Predicated region
    $region34: #{tpu_custom_call.1} parent=1 // pred_check
      _
    $region35: #{tpu_custom_call.1} parent=1 // pred_check_branch
      %81 = sbr.rel (0) target = $region37
    $region36: #{tpu_custom_call.1} parent=1 // pred_region
      %82 = dma.done [#allocation5], 16
    $region37: #{tpu_custom_call.1} parent=1 // pred_fallthru
      _
    // Predicated region
    $region38: #{tpu_custom_call.1} parent=1 // pred_check
      _
    $region39: #{tpu_custom_call.1} parent=1 // pred_check_branch
      %84 = sbr.rel (0) target = $region41
    $region40: #{tpu_custom_call.1} parent=1 // pred_region
      %85 = dma.done [#allocation8], 16
    $region41: #{tpu_custom_call.1} parent=1 // pred_fallthru
      _
    // Predicated region
    $region42: #{tpu_custom_call.1} parent=1 // pred_check
      _
    $region43: #{tpu_custom_call.1} parent=1 // pred_check_branch
      %87 = sbr.rel (0) target = $region45
    $region44: #{tpu_custom_call.1} parent=1 // pred_region
      %88 = dma.done [#allocation8], 16
    $region45: #{tpu_custom_call.1} parent=1 // pred_fallthru
      _
    // Predicated region
    $region46: #{tpu_custom_call.1} parent=1 // pred_check
      _
    $region47: #{tpu_custom_call.1} parent=1 // pred_check_branch
      %90 = sbr.rel (0) target = $region49
    $region48: #{tpu_custom_call.1} parent=1 // pred_region
      %91 = dma.done [#allocation11], 16
    $region49: #{tpu_custom_call.1} parent=1 // pred_fallthru
      _
    // Predicated region
    $region50: #{tpu_custom_call.1} parent=1 // pred_check
      _
    $region51: #{tpu_custom_call.1} parent=1 // pred_check_branch
      %93 = sbr.rel (0) target = $region53
    $region52: #{tpu_custom_call.1} parent=1 // pred_region
      %94 = dma.done [#allocation11], 16
    $region53: #{tpu_custom_call.1} parent=1 // pred_fallthru
      _
    %95 = sfence
    %v96 = vld [vmem:[%s6] sm:$0xff]
    %s97 = scalar_lea.vmem %s6, 8
    %v98 = vld [vmem:[%s97] sm:$0xff]
    %s99 = sld [smem:[#allocation2]]
    %v100 = vstv %s99
    %v101 = vmul.f32 %v96, %v100
    %s102 = sld [smem:[#allocation2 + $0x8]]
    %v103 = vstv %s102
    %v104 = vmul.f32 %v98, %v103
    %v105 = vadd.f32 %v101, %v104
    %s106 = sld [smem:[#allocation6]]
    %v107 = vstv %s106
    %v108 = vadd.f32 %v105, %v107
    %v109 = vmax.f32 %v108, 0.0
    %s110 = sld [smem:[#allocation2 + $0x1]]
    %v111 = vstv %s110
    %v112 = vmul.f32 %v96, %v111
    %s113 = sld [smem:[#allocation2 + $0x9]]
    %v114 = vstv %s113
    %v115 = vmul.f32 %v98, %v114
    %v116 = vadd.f32 %v112, %v115
    %s117 = sld [smem:[#allocation6 + $0x1]]
    %v118 = vstv %s117
    %v119 = vadd.f32 %v116, %v118
    %v120 = vmax.f32 %v119, 0.0
    %s121 = sld [smem:[#allocation2 + $0x2]]
    %v122 = vstv %s121
    %v123 = vmul.f32 %v96, %v122
    %s124 = sld [smem:[#allocation2 + $0xa]]
    %v125 = vstv %s124
    %v126 = vmul.f32 %v98, %v125
    %v127 = vadd.f32 %v123, %v126
    %s128 = sld [smem:[#allocation6 + $0x2]]
    %v129 = vstv %s128
    %v130 = vadd.f32 %v127, %v129
    %v131 = vmax.f32 %v130, 0.0
    %s132 = sld [smem:[#allocation2 + $0x3]]
    %v133 = vstv %s132
    %v134 = vmul.f32 %v96, %v133
    %s135 = sld [smem:[#allocation2 + $0xb]]
    %v136 = vstv %s135
    %v137 = vmul.f32 %v98, %v136
    %v138 = vadd.f32 %v134, %v137
    %s139 = sld [smem:[#allocation6 + $0x3]]
    %v140 = vstv %s139
    %v141 = vadd.f32 %v138, %v140
    %v142 = vmax.f32 %v141, 0.0
    %s143 = sld [smem:[#allocation2 + $0x4]]
    %v144 = vstv %s143
    %v145 = vmul.f32 %v96, %v144
    %s146 = sld [smem:[#allocation2 + $0xc]]
    %v147 = vstv %s146
    %v148 = vmul.f32 %v98, %v147
    %v149 = vadd.f32 %v145, %v148
    %s150 = sld [smem:[#allocation6 + $0x4]]
    %v151 = vstv %s150
    %v152 = vadd.f32 %v149, %v151
    %v153 = vmax.f32 %v152, 0.0
    %s154 = sld [smem:[#allocation2 + $0x5]]
    %v155 = vstv %s154
    %v156 = vmul.f32 %v96, %v155
    %s157 = sld [smem:[#allocation2 + $0xd]]
    %v158 = vstv %s157
    %v159 = vmul.f32 %v98, %v158
    %v160 = vadd.f32 %v156, %v159
    %s161 = sld [smem:[#allocation6 + $0x5]]
    %v162 = vstv %s161
    %v163 = vadd.f32 %v160, %v162
    %v164 = vmax.f32 %v163, 0.0
    %s165 = sld [smem:[#allocation2 + $0x6]]
    %v166 = vstv %s165
    %v167 = vmul.f32 %v96, %v166
    %s168 = sld [smem:[#allocation2 + $0xe]]
    %v169 = vstv %s168
    %v170 = vmul.f32 %v98, %v169
    %v171 = vadd.f32 %v167, %v170
    %s172 = sld [smem:[#allocation6 + $0x6]]
    %v173 = vstv %s172
    %v174 = vadd.f32 %v171, %v173
    %v175 = vmax.f32 %v174, 0.0
    %s176 = sld [smem:[#allocation2 + $0x7]]
    %v177 = vstv %s176
    %v178 = vmul.f32 %v96, %v177
    %s179 = sld [smem:[#allocation2 + $0xf]]
    %v180 = vstv %s179
    %v181 = vmul.f32 %v98, %v180
    %v182 = vadd.f32 %v178, %v181
    %s183 = sld [smem:[#allocation6 + $0x7]]
    %v184 = vstv %s183
    %v185 = vadd.f32 %v182, %v184
    %v186 = vmax.f32 %v185, 0.0
    %s187 = sld [smem:[#allocation7]]
    %v188 = vstv %s187
    %v189 = vmul.f32 %v109, %v188
    %s190 = sld [smem:[#allocation7 + $0x8]]
    %v191 = vstv %s190
    %v192 = vmul.f32 %v120, %v191
    %v193 = vadd.f32 %v189, %v192
    %s194 = sld [smem:[#allocation7 + $0x10]]
    %v195 = vstv %s194
    %v196 = vmul.f32 %v131, %v195
    %v197 = vadd.f32 %v193, %v196
    %s198 = sld [smem:[#allocation7 + $0x18]]
    %v199 = vstv %s198
    %v200 = vmul.f32 %v142, %v199
    %v201 = vadd.f32 %v197, %v200
    %s202 = sld [smem:[#allocation7 + $0x20]]
    %v203 = vstv %s202
    %v204 = vmul.f32 %v153, %v203
    %v205 = vadd.f32 %v201, %v204
    %s206 = sld [smem:[#allocation7 + $0x28]]
    %v207 = vstv %s206
    %v208 = vmul.f32 %v164, %v207
    %v209 = vadd.f32 %v205, %v208
    %s210 = sld [smem:[#allocation7 + $0x30]]
    %v211 = vstv %s210
    %v212 = vmul.f32 %v175, %v211
    %v213 = vadd.f32 %v209, %v212
    %s214 = sld [smem:[#allocation7 + $0x38]]
    %v215 = vstv %s214
    %v216 = vmul.f32 %v186, %v215
    %v217 = vadd.f32 %v213, %v216
    %s218 = sld [smem:[#allocation9]]
    %v219 = vstv %s218
    %v220 = vadd.f32 %v217, %v219
    %v221 = vmax.f32 %v220, 0.0
    %s222 = sld [smem:[#allocation7 + $0x1]]
    %v223 = vstv %s222
    %v224 = vmul.f32 %v109, %v223
    %s225 = sld [smem:[#allocation7 + $0x9]]
    %v226 = vstv %s225
    %v227 = vmul.f32 %v120, %v226
    %v228 = vadd.f32 %v224, %v227
    %s229 = sld [smem:[#allocation7 + $0x11]]
    %v230 = vstv %s229
    %v231 = vmul.f32 %v131, %v230
    %v232 = vadd.f32 %v228, %v231
    %s233 = sld [smem:[#allocation7 + $0x19]]
    %v234 = vstv %s233
    %v235 = vmul.f32 %v142, %v234
    %v236 = vadd.f32 %v232, %v235
    %s237 = sld [smem:[#allocation7 + $0x21]]
    %v238 = vstv %s237
    %v239 = vmul.f32 %v153, %v238
    %v240 = vadd.f32 %v236, %v239
    %s241 = sld [smem:[#allocation7 + $0x29]]
    %v242 = vstv %s241
    %v243 = vmul.f32 %v164, %v242
    %v244 = vadd.f32 %v240, %v243
    %s245 = sld [smem:[#allocation7 + $0x31]]
    %v246 = vstv %s245
    %v247 = vmul.f32 %v175, %v246
    %v248 = vadd.f32 %v244, %v247
    %s249 = sld [smem:[#allocation7 + $0x39]]
    %v250 = vstv %s249
    %v251 = vmul.f32 %v186, %v250
    %v252 = vadd.f32 %v248, %v251
    %s253 = sld [smem:[#allocation9 + $0x1]]
    %v254 = vstv %s253
    %v255 = vadd.f32 %v252, %v254
    %v256 = vmax.f32 %v255, 0.0
    %s257 = sld [smem:[#allocation7 + $0x2]]
    %v258 = vstv %s257
    %v259 = vmul.f32 %v109, %v258
    %s260 = sld [smem:[#allocation7 + $0xa]]
    %v261 = vstv %s260
    %v262 = vmul.f32 %v120, %v261
    %v263 = vadd.f32 %v259, %v262
    %s264 = sld [smem:[#allocation7 + $0x12]]
    %v265 = vstv %s264
    %v266 = vmul.f32 %v131, %v265
    %v267 = vadd.f32 %v263, %v266
    %s268 = sld [smem:[#allocation7 + $0x1a]]
    %v269 = vstv %s268
    %v270 = vmul.f32 %v142, %v269
    %v271 = vadd.f32 %v267, %v270
    %s272 = sld [smem:[#allocation7 + $0x22]]
    %v273 = vstv %s272
    %v274 = vmul.f32 %v153, %v273
    %v275 = vadd.f32 %v271, %v274
    %s276 = sld [smem:[#allocation7 + $0x2a]]
    %v277 = vstv %s276
    %v278 = vmul.f32 %v164, %v277
    %v279 = vadd.f32 %v275, %v278
    %s280 = sld [smem:[#allocation7 + $0x32]]
    %v281 = vstv %s280
    %v282 = vmul.f32 %v175, %v281
    %v283 = vadd.f32 %v279, %v282
    %s284 = sld [smem:[#allocation7 + $0x3a]]
    %v285 = vstv %s284
    %v286 = vmul.f32 %v186, %v285
    %v287 = vadd.f32 %v283, %v286
    %s288 = sld [smem:[#allocation9 + $0x2]]
    %v289 = vstv %s288
    %v290 = vadd.f32 %v287, %v289
    %v291 = vmax.f32 %v290, 0.0
    %s292 = sld [smem:[#allocation7 + $0x3]]
    %v293 = vstv %s292
    %v294 = vmul.f32 %v109, %v293
    %s295 = sld [smem:[#allocation7 + $0xb]]
    %v296 = vstv %s295
    %v297 = vmul.f32 %v120, %v296
    %v298 = vadd.f32 %v294, %v297
    %s299 = sld [smem:[#allocation7 + $0x13]]
    %v300 = vstv %s299
    %v301 = vmul.f32 %v131, %v300
    %v302 = vadd.f32 %v298, %v301
    %s303 = sld [smem:[#allocation7 + $0x1b]]
    %v304 = vstv %s303
    %v305 = vmul.f32 %v142, %v304
    %v306 = vadd.f32 %v302, %v305
    %s307 = sld [smem:[#allocation7 + $0x23]]
    %v308 = vstv %s307
    %v309 = vmul.f32 %v153, %v308
    %v310 = vadd.f32 %v306, %v309
    %s311 = sld [smem:[#allocation7 + $0x2b]]
    %v312 = vstv %s311
    %v313 = vmul.f32 %v164, %v312
    %v314 = vadd.f32 %v310, %v313
    %s315 = sld [smem:[#allocation7 + $0x33]]
    %v316 = vstv %s315
    %v317 = vmul.f32 %v175, %v316
    %v318 = vadd.f32 %v314, %v317
    %s319 = sld [smem:[#allocation7 + $0x3b]]
    %v320 = vstv %s319
    %v321 = vmul.f32 %v186, %v320
    %v322 = vadd.f32 %v318, %v321
    %s323 = sld [smem:[#allocation9 + $0x3]]
    %v324 = vstv %s323
    %v325 = vadd.f32 %v322, %v324
    %v326 = vmax.f32 %v325, 0.0
    %s327 = sld [smem:[#allocation7 + $0x4]]
    %v328 = vstv %s327
    %v329 = vmul.f32 %v109, %v328
    %s330 = sld [smem:[#allocation7 + $0xc]]
    %v331 = vstv %s330
    %v332 = vmul.f32 %v120, %v331
    %v333 = vadd.f32 %v329, %v332
    %s334 = sld [smem:[#allocation7 + $0x14]]
    %v335 = vstv %s334
    %v336 = vmul.f32 %v131, %v335
    %v337 = vadd.f32 %v333, %v336
    %s338 = sld [smem:[#allocation7 + $0x1c]]
    %v339 = vstv %s338
    %v340 = vmul.f32 %v142, %v339
    %v341 = vadd.f32 %v337, %v340
    %s342 = sld [smem:[#allocation7 + $0x24]]
    %v343 = vstv %s342
    %v344 = vmul.f32 %v153, %v343
    %v345 = vadd.f32 %v341, %v344
    %s346 = sld [smem:[#allocation7 + $0x2c]]
    %v347 = vstv %s346
    %v348 = vmul.f32 %v164, %v347
    %v349 = vadd.f32 %v345, %v348
    %s350 = sld [smem:[#allocation7 + $0x34]]
    %v351 = vstv %s350
    %v352 = vmul.f32 %v175, %v351
    %v353 = vadd.f32 %v349, %v352
    %s354 = sld [smem:[#allocation7 + $0x3c]]
    %v355 = vstv %s354
    %v356 = vmul.f32 %v186, %v355
    %v357 = vadd.f32 %v353, %v356
    %s358 = sld [smem:[#allocation9 + $0x4]]
    %v359 = vstv %s358
    %v360 = vadd.f32 %v357, %v359
    %v361 = vmax.f32 %v360, 0.0
    %s362 = sld [smem:[#allocation7 + $0x5]]
    %v363 = vstv %s362
    %v364 = vmul.f32 %v109, %v363
    %s365 = sld [smem:[#allocation7 + $0xd]]
    %v366 = vstv %s365
    %v367 = vmul.f32 %v120, %v366
    %v368 = vadd.f32 %v364, %v367
    %s369 = sld [smem:[#allocation7 + $0x15]]
    %v370 = vstv %s369
    %v371 = vmul.f32 %v131, %v370
    %v372 = vadd.f32 %v368, %v371
    %s373 = sld [smem:[#allocation7 + $0x1d]]
    %v374 = vstv %s373
    %v375 = vmul.f32 %v142, %v374
    %v376 = vadd.f32 %v372, %v375
    %s377 = sld [smem:[#allocation7 + $0x25]]
    %v378 = vstv %s377
    %v379 = vmul.f32 %v153, %v378
    %v380 = vadd.f32 %v376, %v379
    %s381 = sld [smem:[#allocation7 + $0x2d]]
    %v382 = vstv %s381
    %v383 = vmul.f32 %v164, %v382
    %v384 = vadd.f32 %v380, %v383
    %s385 = sld [smem:[#allocation7 + $0x35]]
    %v386 = vstv %s385
    %v387 = vmul.f32 %v175, %v386
    %v388 = vadd.f32 %v384, %v387
    %s389 = sld [smem:[#allocation7 + $0x3d]]
    %v390 = vstv %s389
    %v391 = vmul.f32 %v186, %v390
    %v392 = vadd.f32 %v388, %v391
    %s393 = sld [smem:[#allocation9 + $0x5]]
    %v394 = vstv %s393
    %v395 = vadd.f32 %v392, %v394
    %v396 = vmax.f32 %v395, 0.0
    %s397 = sld [smem:[#allocation7 + $0x6]]
    %v398 = vstv %s397
    %v399 = vmul.f32 %v109, %v398
    %s400 = sld [smem:[#allocation7 + $0xe]]
    %v401 = vstv %s400
    %v402 = vmul.f32 %v120, %v401
    %v403 = vadd.f32 %v399, %v402
    %s404 = sld [smem:[#allocation7 + $0x16]]
    %v405 = vstv %s404
    %v406 = vmul.f32 %v131, %v405
    %v407 = vadd.f32 %v403, %v406
    %s408 = sld [smem:[#allocation7 + $0x1e]]
    %v409 = vstv %s408
    %v410 = vmul.f32 %v142, %v409
    %v411 = vadd.f32 %v407, %v410
    %s412 = sld [smem:[#allocation7 + $0x26]]
    %v413 = vstv %s412
    %v414 = vmul.f32 %v153, %v413
    %v415 = vadd.f32 %v411, %v414
    %s416 = sld [smem:[#allocation7 + $0x2e]]
    %v417 = vstv %s416
    %v418 = vmul.f32 %v164, %v417
    %v419 = vadd.f32 %v415, %v418
    %s420 = sld [smem:[#allocation7 + $0x36]]
    %v421 = vstv %s420
    %v422 = vmul.f32 %v175, %v421
    %v423 = vadd.f32 %v419, %v422
    %s424 = sld [smem:[#allocation7 + $0x3e]]
    %v425 = vstv %s424
    %v426 = vmul.f32 %v186, %v425
    %v427 = vadd.f32 %v423, %v426
    %s428 = sld [smem:[#allocation9 + $0x6]]
    %v429 = vstv %s428
    %v430 = vadd.f32 %v427, %v429
    %v431 = vmax.f32 %v430, 0.0
    %s432 = sld [smem:[#allocation7 + $0x7]]
    %v433 = vstv %s432
    %v434 = vmul.f32 %v109, %v433
    %s435 = sld [smem:[#allocation7 + $0xf]]
    %v436 = vstv %s435
    %v437 = vmul.f32 %v120, %v436
    %v438 = vadd.f32 %v434, %v437
    %s439 = sld [smem:[#allocation7 + $0x17]]
    %v440 = vstv %s439
    %v441 = vmul.f32 %v131, %v440
    %v442 = vadd.f32 %v438, %v441
    %s443 = sld [smem:[#allocation7 + $0x1f]]
    %v444 = vstv %s443
    %v445 = vmul.f32 %v142, %v444
    %v446 = vadd.f32 %v442, %v445
    %s447 = sld [smem:[#allocation7 + $0x27]]
    %v448 = vstv %s447
    %v449 = vmul.f32 %v153, %v448
    %v450 = vadd.f32 %v446, %v449
    %s451 = sld [smem:[#allocation7 + $0x2f]]
    %v452 = vstv %s451
    %v453 = vmul.f32 %v164, %v452
    %v454 = vadd.f32 %v450, %v453
    %s455 = sld [smem:[#allocation7 + $0x37]]
    %v456 = vstv %s455
    %v457 = vmul.f32 %v175, %v456
    %v458 = vadd.f32 %v454, %v457
    %s459 = sld [smem:[#allocation7 + $0x3f]]
    %v460 = vstv %s459
    %v461 = vmul.f32 %v186, %v460
    %v462 = vadd.f32 %v458, %v461
    %s463 = sld [smem:[#allocation9 + $0x7]]
    %v464 = vstv %s463
    %v465 = vadd.f32 %v462, %v464
    %v466 = vmax.f32 %v465, 0.0
    %s467 = sld [smem:[#allocation10]]
    %v468 = vstv %s467
    %v469 = vmul.f32 %v221, %v468
    %s470 = sld [smem:[#allocation10 + $0x3]]
    %v471 = vstv %s470
    %v472 = vmul.f32 %v256, %v471
    %v473 = vadd.f32 %v469, %v472
    %s474 = sld [smem:[#allocation10 + $0x6]]
    %v475 = vstv %s474
    %v476 = vmul.f32 %v291, %v475
    %v477 = vadd.f32 %v473, %v476
    %s478 = sld [smem:[#allocation10 + $0x9]]
    %v479 = vstv %s478
    %v480 = vmul.f32 %v326, %v479
    %v481 = vadd.f32 %v477, %v480
    %s482 = sld [smem:[#allocation10 + $0xc]]
    %v483 = vstv %s482
    %v484 = vmul.f32 %v361, %v483
    %v485 = vadd.f32 %v481, %v484
    %s486 = sld [smem:[#allocation10 + $0xf]]
    %v487 = vstv %s486
    %v488 = vmul.f32 %v396, %v487
    %v489 = vadd.f32 %v485, %v488
    %s490 = sld [smem:[#allocation10 + $0x12]]
    %v491 = vstv %s490
    %v492 = vmul.f32 %v431, %v491
    %v493 = vadd.f32 %v489, %v492
    %s494 = sld [smem:[#allocation10 + $0x15]]
    %v495 = vstv %s494
    %v496 = vmul.f32 %v466, %v495
    %v497 = vadd.f32 %v493, %v496
    %s498 = sld [smem:[#allocation12]]
    %v499 = vstv %s498
    %v500 = vadd.f32 %v497, %v499
    %501 = vst [vmem:[#allocation13] sm:$0xff] %v500
    %s502 = sld [smem:[#allocation10 + $0x1]]
    %v503 = vstv %s502
    %v504 = vmul.f32 %v221, %v503
    %s505 = sld [smem:[#allocation10 + $0x4]]
    %v506 = vstv %s505
    %v507 = vmul.f32 %v256, %v506
    %v508 = vadd.f32 %v504, %v507
    %s509 = sld [smem:[#allocation10 + $0x7]]
    %v510 = vstv %s509
    %v511 = vmul.f32 %v291, %v510
    %v512 = vadd.f32 %v508, %v511
    %s513 = sld [smem:[#allocation10 + $0xa]]
    %v514 = vstv %s513
    %v515 = vmul.f32 %v326, %v514
    %v516 = vadd.f32 %v512, %v515
    %s517 = sld [smem:[#allocation10 + $0xd]]
    %v518 = vstv %s517
    %v519 = vmul.f32 %v361, %v518
    %v520 = vadd.f32 %v516, %v519
    %s521 = sld [smem:[#allocation10 + $0x10]]
    %v522 = vstv %s521
    %v523 = vmul.f32 %v396, %v522
    %v524 = vadd.f32 %v520, %v523
    %s525 = sld [smem:[#allocation10 + $0x13]]
    %v526 = vstv %s525
    %v527 = vmul.f32 %v431, %v526
    %v528 = vadd.f32 %v524, %v527
    %s529 = sld [smem:[#allocation10 + $0x16]]
    %v530 = vstv %s529
    %v531 = vmul.f32 %v466, %v530
    %v532 = vadd.f32 %v528, %v531
    %s533 = sld [smem:[#allocation12 + $0x1]]
    %v534 = vstv %s533
    %v535 = vadd.f32 %v532, %v534
    %s536 = scalar_lea.vmem [#allocation13], 8
    %537 = vst [vmem:[%s536] sm:$0xff] %v535
    %s538 = sld [smem:[#allocation10 + $0x2]]
    %v539 = vstv %s538
    %v540 = vmul.f32 %v221, %v539
    %s541 = sld [smem:[#allocation10 + $0x5]]
    %v542 = vstv %s541
    %v543 = vmul.f32 %v256, %v542
    %v544 = vadd.f32 %v540, %v543
    %s545 = sld [smem:[#allocation10 + $0x8]]
    %v546 = vstv %s545
    %v547 = vmul.f32 %v291, %v546
    %v548 = vadd.f32 %v544, %v547
    %s549 = sld [smem:[#allocation10 + $0xb]]
    %v550 = vstv %s549
    %v551 = vmul.f32 %v326, %v550
    %v552 = vadd.f32 %v548, %v551
    %s553 = sld [smem:[#allocation10 + $0xe]]
    %v554 = vstv %s553
    %v555 = vmul.f32 %v361, %v554
    %v556 = vadd.f32 %v552, %v555
    %s557 = sld [smem:[#allocation10 + $0x11]]
    %v558 = vstv %s557
    %v559 = vmul.f32 %v396, %v558
    %v560 = vadd.f32 %v556, %v559
    %s561 = sld [smem:[#allocation10 + $0x14]]
    %v562 = vstv %s561
    %v563 = vmul.f32 %v431, %v562
    %v564 = vadd.f32 %v560, %v563
    %s565 = sld [smem:[#allocation10 + $0x17]]
    %v566 = vstv %s565
    %v567 = vmul.f32 %v466, %v566
    %v568 = vadd.f32 %v564, %v567
    %s569 = sld [smem:[#allocation12 + $0x2]]
    %v570 = vstv %s569
    %v571 = vadd.f32 %v568, %v570
    %s572 = scalar_lea.vmem [#allocation13], 16
    %573 = vst [vmem:[%s572] sm:$0xff] %v571
    // Predicated region
    $region54: #{tpu_custom_call.1} parent=1 // pred_check
      _
    $region55: #{tpu_custom_call.1} parent=1 // pred_check_branch
      %575 = sbr.rel (0) target = $region57
    $region56: #{tpu_custom_call.1} parent=1 // pred_region
      %s577 = ssub.s32 384, 384
      %578 = vsyncadd [#allocation3], %s577
      %s579 = sshll.u32 [#allocation13], 4
      %s580 = int_to_ptr.vmem [resolvable:$true] %s579
      %585 = dma.vmem_to_hbm [thread:$0]  %s580, 384, %s7, [#allocation3], 128, 128, 8
    $region57: #{tpu_custom_call.1} parent=1 // pred_fallthru
      _
    // Predicated region
    $region58: #{tpu_custom_call.1} parent=1 // pred_check
      _
    $region59: #{tpu_custom_call.1} parent=1 // pred_check_branch
      %587 = sbr.rel (0) target = $region61
    $region60: #{tpu_custom_call.1} parent=1 // pred_region
      %588 = dma.done [#allocation3], 384
    $region61: #{tpu_custom_call.1} parent=1 // pred_fallthru
      _
    %589 = vsyncpa [#allocation3], 1
    %590 = vsyncpa [#allocation4], 1
    %591 = vsyncpa [#allocation5], 1
    %592 = vsyncpa [#allocation8], 1
    %593 = vsyncpa [#allocation11], 1

</llo_original>
